<compile_context>
chip_gen: v7x
topology: tpu7x:2x2x1
jax: 0.10.0
libtpu: 0.0.40
codegen_flags: <defaults>
</compile_context>

<pallas_src>
import functools
import math

import jax
import jax.numpy as jnp
import numpy as np
from jax.experimental import pallas as pl
from jax.experimental.pallas import tpu as pltpu

_LANE = 128


def rowpool_kernel(mask_ref, x_ref, o_ref, *, ts):
    """One grid step: `row_tile` independent rows x the full source axis Ts."""
    rt = x_ref.shape[0]
    dtype = x_ref.dtype
    neg_inf = jnp.asarray(-jnp.inf, dtype=dtype)

    nb_full = ts // _LANE          # number of full 128-lane column blocks
    rem = ts - nb_full * _LANE     # width of the trailing partial block

    # Hoisted lane iota + wrap masks (shared by every column block / pass).
    lane = jax.lax.broadcasted_iota(jnp.int32, (1, _LANE), 1)
    wrap = {}
    s = 1
    while s < _LANE:
        wrap[s] = lane < s
        s *= 2

    def scan_block(xb, valid):
        # Intra-128-lane Hillis-Steele cumulative max.  `xb` is (rt, 128);
        # lanes >= `valid` are -inf on entry.  Lanes [0, valid) of the result
        # hold the in-block prefix max.
        s = 1
        while s < valid:
            rolled = pltpu.roll(xb, s, 1)
            # Wrapped-in lanes (lane < s) come from lanes [128-s, 128); they
            # are provably still -inf unless 2*s - 1 > 128 - valid.
            if 2 * s - 1 > _LANE - valid:
                rolled = jnp.where(wrap[s], neg_inf, rolled)
            xb = jnp.maximum(xb, rolled)
            s *= 2
        return xb

    carry = None  # (rt, 1) running max over all previous column blocks

    # Full 128-lane column blocks (per-block loads keep temporaries small).
    for b in range(nb_full):
        sl = pl.ds(b * _LANE, _LANE)
        xb = jnp.where(mask_ref[:, sl] > 0, neg_inf, x_ref[:, sl])
        xb = scan_block(xb, _LANE)
        if carry is not None:
            xb = jnp.maximum(xb, carry)
        o_ref[:, sl] = xb
        if b + 1 < nb_full or rem:
            carry = xb[:, _LANE - 1:_LANE]

    # Trailing partial block (Ts % 128 != 0): pad to 128 lanes with -inf in
    # VMEM (never touches HBM), scan only as far as needed, store the valid
    # prefix.
    if rem:
        sl = pl.ds(nb_full * _LANE, rem)
        xb = jnp.where(mask_ref[:, sl] > 0, neg_inf, x_ref[:, sl])
        xb = jnp.concatenate(
            [xb, jnp.full((rt, _LANE - rem), neg_inf, dtype=dtype)], axis=-1)
        xb = scan_block(xb, rem)
        if carry is not None:
            xb = jnp.maximum(xb, carry)
        o_ref[:, sl] = xb[:, :rem]


def _sublane_multiple(dtype):
    itemsize = jnp.dtype(dtype).itemsize
    return 8 * max(1, 4 // itemsize)       # 8 for f32, 16 for bf16, 32 for i8


def _vmem_budget():
    try:
        cap = int(pltpu.get_tpu_info().vmem_capacity_bytes)
    except Exception:
        cap = 64 * 1024 * 1024             # conservative (v7x-sized VMEM)
    limit = min((cap * 3) // 4, 96 * 1024 * 1024)
    limit = max(limit, 32 * 1024 * 1024)
    # Budget: 2x(in) + 2x(out) pipeline buffers + ~2 blocks of scan temps.
    block_target = limit // 8
    return limit, block_target


def _choose_row_tile(R, Ts, dtype, N, block_target_bytes):
    sub = _sublane_multiple(dtype)
    if R <= sub:
        return R                           # full-extent block (always legal)
    itemsize = jnp.dtype(dtype).itemsize
    upper = max(sub, block_target_bytes // max(1, Ts * itemsize))
    upper = min(upper, R)
    # Keep enough grid steps for megacore sharding / pipelining (v7x: 2 TCs).
    min_steps = 8
    if N * (-(-R // upper)) < min_steps:
        needed_r_steps = -(-min_steps // N)
        upper = min(upper, max(sub, R // needed_r_steps))
    upper = max(sub, min(upper, R))
    cand = (upper // sub) * sub
    # Prefer a divisor of R (multiple of sub) within 2x of the target so the
    # last block is not ragged; otherwise accept a ragged edge.
    c = cand
    lo = max(sub, cand // 2)
    while c >= lo:
        if R % c == 0:
            return c
        c -= sub
    return cand


def row_pool(x, src_mask, *, row_tile=None):
    """x: (N, C, Tt, Ts) float array; src_mask: (N, Ts) bool (True = masked)."""
    N, C, Tt, Ts = x.shape
    R = C * Tt
    itemsize = jnp.dtype(x.dtype).itemsize

    x_r = x.reshape(N, R, Ts)                            # metadata-only
    mask = src_mask.astype(jnp.int32).reshape(N, 1, Ts)  # tiny

    vmem_limit, block_target = _vmem_budget()
    if row_tile is None:
        row_tile = _choose_row_tile(R, Ts, x.dtype, N, block_target)

    grid = (N, pl.cdiv(R, row_tile))

    passes = max(1, math.ceil(math.log2(min(max(Ts, 2), _LANE))))
    cost = pl.CostEstimate(
        flops=int(2 * passes * N * R * Ts),
        transcendentals=0,
        bytes_accessed=int(2 * N * R * Ts * itemsize + N * Ts * 4),
    )

    out = pl.pallas_call(
        functools.partial(rowpool_kernel, ts=Ts),
        out_shape=jax.ShapeDtypeStruct((N, R, Ts), x.dtype),
        grid=grid,
        in_specs=[
            # Mask stays resident across the row-tile axis (index_map ignores r).
            pl.BlockSpec((None, 1, Ts), lambda n, r: (n, 0, 0)),
            pl.BlockSpec((None, row_tile, Ts), lambda n, r: (n, r, 0)),
        ],
        out_specs=pl.BlockSpec((None, row_tile, Ts), lambda n, r: (n, r, 0)),
        compiler_params=pltpu.CompilerParams(
            dimension_semantics=("parallel", "parallel"),
            vmem_limit_bytes=int(vmem_limit),
        ),
        cost_estimate=cost,
    )(mask, x_r)

    return out.reshape(N, C, Tt, Ts)


def row_pool_reference(x, src_mask):
    """Pure numpy reference mirroring the PyTorch loop (masked cummax)."""
    x = np.asarray(x, dtype=np.float32).copy()
    mask = np.asarray(src_mask)
    N, C, Tt, Ts = x.shape
    out = np.empty_like(x)
    for n in range(N):
        row = x[n].copy()                      # (C, Tt, Ts)
        row[:, :, mask[n]] = -np.inf
        for j in range(Ts):
            out[n, :, :, j] = row[:, :, : j + 1].max(axis=-1)
    return out


if __name__ == "__main__":
    root = jax.random.PRNGKey(0)

    cases = [
        # (N, C, Tt, Ts, dtype)         paths exercised
        (2, 4, 8, 16, jnp.float32),    # Ts < 128 tail-only, skip-select path
        (2, 2, 4, 160, jnp.float32),   # full block + partial tail with carry
        (1, 3, 2, 256, jnp.float32),   # two full blocks, cross-block carry
        (1, 5, 4, 48, jnp.float32),    # ragged R (row_tile does not divide R)
        (2, 2, 4, 128, jnp.bfloat16),  # bf16, single exact 128-lane block
    ]

    for (N, C, Tt, Ts, dtype) in cases:
        root, kx, km = jax.random.split(root, 3)
        x = jax.random.normal(kx, (N, C, Tt, Ts), dtype=jnp.float32).astype(dtype)
        # Mask the tail of the source dim per batch element plus some random
        # interior positions.
        lengths = jnp.maximum(1, Ts - 5 * jnp.arange(N))
        src_mask = jnp.arange(Ts)[None, :] >= lengths[:, None]
        src_mask = jnp.logical_or(src_mask, jax.random.bernoulli(km, 0.15, (N, Ts)))

        out = jax.block_until_ready(row_pool(x, src_mask))

        got = np.asarray(out.astype(jnp.float32))
        ref = row_pool_reference(np.asarray(x.astype(jnp.float32)),
                                 np.asarray(src_mask))
        np.testing.assert_allclose(got, ref, rtol=1e-6, atol=1e-6)

    print("KERNEL_OK")
</pallas_src>

<mosaic_0001>
module attributes {stable_mosaic.version = 11 : i64} {
  func.func @rowpool_kernel(%arg0: i32, %arg1: i32, %arg2: memref<1x1x16xi32, #tpu.memory_space<vmem>>, %arg3: memref<1x8x16xf32, #tpu.memory_space<vmem>>, %arg4: memref<1x8x16xf32, #tpu.memory_space<vmem>>) attributes {dimension_semantics = [#tpu.dimension_semantics<parallel>, #tpu.dimension_semantics<parallel>], iteration_bounds = array<i64: 2, 4>, scalar_prefetch = 0 : i64, scratch_operands = 0 : i64, tpu.core_type = #tpu.core_type<tc>, window_params = [{transform_indices = @transform_0, window_bounds = array<i64: 1, 1, 16>}, {transform_indices = @transform_1, window_bounds = array<i64: 1, 8, 16>}, {transform_indices = @transform_2, window_bounds = array<i64: 1, 8, 16>}]} {
    %c0 = arith.constant 0 : index
    %c0_0 = arith.constant 0 : index
    %c0_1 = arith.constant 0 : index
    %0 = vector.load %arg2[%c0, %c0_0, %c0_1] : memref<1x1x16xi32, #tpu.memory_space<vmem>>, vector<1x1x16xi32>
    %1 = vector.shape_cast %0 : vector<1x1x16xi32> to vector<1x16xi32>
    %c0_i32 = arith.constant 0 : i32
    %2 = vector.broadcast %c0_i32 : i32 to vector<1x16xi32>
    %3 = arith.cmpi sgt, %1, %2 : vector<1x16xi32>
    %c0_2 = arith.constant 0 : index
    %c0_3 = arith.constant 0 : index
    %c0_4 = arith.constant 0 : index
    %4 = vector.load %arg3[%c0_2, %c0_3, %c0_4] : memref<1x8x16xf32, #tpu.memory_space<vmem>>, vector<1x8x16xf32>
    %5 = vector.shape_cast %4 : vector<1x8x16xf32> to vector<8x16xf32>
    %cst = arith.constant 0xFF800000 : f32
    %6 = vector.shape_cast %3 : vector<1x16xi1> to vector<1x16xi1>
    %7 = vector.broadcast %6 : vector<1x16xi1> to vector<8x16xi1>
    %8 = vector.broadcast %cst : f32 to vector<8x16xf32>
    %9 = arith.select %7, %8, %5 : vector<8x16xi1>, vector<8x16xf32>
    %cst_5 = arith.constant 0xFF800000 : f32
    %10 = vector.broadcast %cst_5 : f32 to vector<8x112xf32>
    %11 = tpu.concatenate %9, %10 in 1 : vector<8x16xf32>, vector<8x112xf32> -> vector<8x128xf32>
    %c1_i32 = arith.constant 1 : i32
    %12 = tpu.dynamic_rotate %11 by %c1_i32 dim 1 : vector<8x128xf32>, i32 -> vector<8x128xf32>
    %13 = arith.maximumf %11, %12 : vector<8x128xf32>
    %c2_i32 = arith.constant 2 : i32
    %14 = tpu.dynamic_rotate %13 by %c2_i32 dim 1 : vector<8x128xf32>, i32 -> vector<8x128xf32>
    %15 = arith.maximumf %13, %14 : vector<8x128xf32>
    %c4_i32 = arith.constant 4 : i32
    %16 = tpu.dynamic_rotate %15 by %c4_i32 dim 1 : vector<8x128xf32>, i32 -> vector<8x128xf32>
    %17 = arith.maximumf %15, %16 : vector<8x128xf32>
    %c8_i32 = arith.constant 8 : i32
    %18 = tpu.dynamic_rotate %17 by %c8_i32 dim 1 : vector<8x128xf32>, i32 -> vector<8x128xf32>
    %19 = arith.maximumf %17, %18 : vector<8x128xf32>
    %20 = vector.extract_strided_slice %19 {offsets = [0, 0], sizes = [8, 16], strides = [1, 1]} : vector<8x128xf32> to vector<8x16xf32>
    %c0_6 = arith.constant 0 : index
    %c0_7 = arith.constant 0 : index
    %c0_8 = arith.constant 0 : index
    %21 = vector.load %arg4[%c0_6, %c0_7, %c0_8] : memref<1x8x16xf32, #tpu.memory_space<vmem>>, vector<1x8x16xf32>
    %22 = vector.shape_cast %21 : vector<1x8x16xf32> to vector<8x16xf32>
    %23 = vector.shape_cast %20 : vector<8x16xf32> to vector<1x8x16xf32>
    tpu.vector_store %arg4[%c0_6, %c0_7, %c0_8], %23 {strides = array<i32>} : memref<1x8x16xf32, #tpu.memory_space<vmem>>, vector<1x8x16xf32>,
    return
  }
  func.func @transform_0(%arg0: i32, %arg1: i32) -> (i32, i32, i32) {
    %c0_i32 = arith.constant 0 : i32
    %c0_i32_0 = arith.constant 0 : i32
    %c0_i32_1 = arith.constant 0 : i32
    return %arg0, %c0_i32, %c0_i32_0 : i32, i32, i32
  }
  func.func @transform_1(%arg0: i32, %arg1: i32) -> (i32, i32, i32) {
    %c0_i32 = arith.constant 0 : i32
    %c0_i32_0 = arith.constant 0 : i32
    return %arg0, %arg1, %c0_i32 : i32, i32, i32
  }
  func.func @transform_2(%arg0: i32, %arg1: i32) -> (i32, i32, i32) {
    %c0_i32 = arith.constant 0 : i32
    %c0_i32_0 = arith.constant 0 : i32
    return %arg0, %arg1, %c0_i32 : i32, i32, i32
  }
}

</mosaic_0001>

<llo_original>
// kernel: tpu_custom_call.1
$region0: #{tpu_custom_call.1}
  #allocation0 [shape = 'u32[]', space=smem, size = 0x4, offset = 0x4, fixed_abs, tag = 'smem constant byte address 0x4 - core index']
  #allocation1 [shape = 'u32[144,128]{1,0:T(1,128)}', space=vmem, size = 0x12000, scoped, tag = 'internal scratch']
  %s0 = inlined_call_operand.vmem [shape: s32[2,1,16], index: 0, kind: input, shape index: {}]
  %s1 = inlined_call_operand.vmem [shape: f32[2,32,16], index: 1, kind: input, shape index: {}]
  %s2 = inlined_call_operand.vmem [shape: f32[2,32,16], index: 2, kind: output, shape index: {}]
  %s3 = sld [smem:[#allocation0]]
  $region41: #{tpu_custom_call.1} parent=0
    _
  %s5 = ssub.s32 1, %s3
  %s6 = scalar_select 0, %s5, %s3
  loop: start=0, step=1, limit=10
  $region2: #{tpu_custom_call.1} parent=0 // loop_pre_header
    _
  $region3: #{tpu_custom_call.1} parent=0 // loop_header
    %s8 = sphi 0, %s12
    %p9 = scmp.ge.s32.totalorder %s8, 10
    %s15 = sphi 0, %s27
    %s16 = sphi 0, %s23
    %s17 = sphi 0, %s15
    %s18 = sphi 0, %s16
    %s19 = sphi 0, %s17
    %s20 = sphi 0, %s18
    %s30 = sphi 0, %s32
    %s33 = sphi 0, %s30
    %s34 = sphi 0, %s33
    %s50 = sphi 0, %s34
    %s58 = sphi 0, %s60
    %s61 = sphi 0, %s58
    %s62 = sphi 0, %s61
    %s78 = sphi 0, %s62
    %s86 = sphi 0, %s88
    %s89 = sphi 0, %s86
    %s90 = sphi 0, %s89
    %s106 = sphi 0, %s90
  $region4: #{tpu_custom_call.1} parent=0 // loop_header_branch
    %11 = sbr.rel (%p9) target = $region8
  $region5: #{tpu_custom_call.1} parent=0 // loop_body
    %s13 = ssub.s32 %s8, 1
    %s14 = ssub.s32 %s8, 2
    %s21 = sadd.s32 1, %s16
    %p22 = scmp.ge.s32.totalorder %s21, 4
    %s23 = scalar_select %p22, 0, %s21
    %s24 = sadd.s32 1, %s15
    %s25 = scalar_select %p22, %s24, %s15
    %p26 = scmp.ge.s32.totalorder %s25, 2
    %s27 = scalar_select %p26, 0, %s25
    %s28 = ssub.s32 %s15, %s27
    %p29 = scmp.eq.s32.totalorder %s28, 0
    %s31 = sadd.s32 %s30, 1
    %s32 = scalar_select %p29, %s30, %s31
    %p35 = pneg %p29
    %p36 = scmp.eq.s32.totalorder %s8, 7
    %p37 = por %p35, %p36
    %p38 = scmp.ne.s32.totalorder %s30, %s33
    %p39 = scmp.eq.s32.totalorder %s8, 0
    %p40 = por %p38, %p39
    %p41 = scmp.ne.s32.totalorder %s30, %s33
    %p42 = scmp.eq.s32.totalorder %s13, 7
    %p43 = por %p41, %p42
    %p44 = scmp.ne.s32.totalorder %s33, %s34
    %p45 = scmp.eq.s32.totalorder %s13, 0
    %p46 = por %p44, %p45
    %p47 = scmp.ne.s32.totalorder %s33, %s34
    %p48 = scmp.eq.s32.totalorder %s14, 7
    %p49 = por %p47, %p48
    %p51 = scmp.ne.s32.totalorder %s34, %s50
    %p52 = scmp.eq.s32.totalorder %s14, 0
    %p53 = por %p51, %p52
    %s54 = ssub.s32 %s15, %s27
    %s55 = ssub.s32 %s16, %s23
    %s56 = sor.u32 %s54, %s55
    %p57 = scmp.eq.s32.totalorder %s56, 0
    %s59 = sadd.s32 %s58, 1
    %s60 = scalar_select %p57, %s58, %s59
    %p63 = pneg %p57
    %p64 = scmp.eq.s32.totalorder %s8, 7
    %p65 = por %p63, %p64
    %p66 = scmp.ne.s32.totalorder %s58, %s61
    %p67 = scmp.eq.s32.totalorder %s8, 0
    %p68 = por %p66, %p67
    %p69 = scmp.ne.s32.totalorder %s58, %s61
    %p70 = scmp.eq.s32.totalorder %s13, 7
    %p71 = por %p69, %p70
    %p72 = scmp.ne.s32.totalorder %s61, %s62
    %p73 = scmp.eq.s32.totalorder %s13, 0
    %p74 = por %p72, %p73
    %p75 = scmp.ne.s32.totalorder %s61, %s62
    %p76 = scmp.eq.s32.totalorder %s14, 7
    %p77 = por %p75, %p76
    %p79 = scmp.ne.s32.totalorder %s62, %s78
    %p80 = scmp.eq.s32.totalorder %s14, 0
    %p81 = por %p79, %p80
    %s82 = ssub.s32 %s15, %s27
    %s83 = ssub.s32 %s16, %s23
    %s84 = sor.u32 %s82, %s83
    %p85 = scmp.eq.s32.totalorder %s84, 0
    %s87 = sadd.s32 %s86, 1
    %s88 = scalar_select %p85, %s86, %s87
    %p91 = pneg %p85
    %p92 = scmp.eq.s32.totalorder %s8, 7
    %p93 = por %p91, %p92
    %p94 = scmp.ne.s32.totalorder %s86, %s89
    %p95 = scmp.eq.s32.totalorder %s8, 0
    %p96 = por %p94, %p95
    %p97 = scmp.ne.s32.totalorder %s86, %s89
    %p98 = scmp.eq.s32.totalorder %s13, 7
    %p99 = por %p97, %p98
    %p100 = scmp.ne.s32.totalorder %s89, %s90
    %p101 = scmp.eq.s32.totalorder %s13, 0
    %p102 = por %p100, %p101
    %p103 = scmp.ne.s32.totalorder %s89, %s90
    %p104 = scmp.eq.s32.totalorder %s14, 7
    %p105 = por %p103, %p104
    %p107 = scmp.ne.s32.totalorder %s90, %s106
    %p108 = scmp.eq.s32.totalorder %s14, 0
    %p109 = por %p107, %p108
    %p110 = scmp.le.s32.totalorder 1, %s8
    %p111 = scmp.lt.s32.totalorder %s8, 9
    %p112 = pnand %p110, %p111
    %p113 = pneg %p112
    // Predicated region
    $region9: #{tpu_custom_call.1} parent=5 // pred_check
      _
    $region10: #{tpu_custom_call.1} parent=5 // pred_check_branch
      %115 = sbr.rel (%p112) target = $region12
    $region11: #{tpu_custom_call.1} parent=5 // pred_region
      %s116 = ssub.s32 %s8, 1
    $region12: #{tpu_custom_call.1} parent=5 // pred_fallthru
      _
    %p117 = scmp.lt.s32.totalorder %s8, 8
    // Predicated region
    $region13: #{tpu_custom_call.1} parent=5 // pred_check
      %p118 = pneg %p117
    $region14: #{tpu_custom_call.1} parent=5 // pred_check_branch
      %120 = sbr.rel (%p118) target = $region16
    $region15: #{tpu_custom_call.1} parent=5 // pred_region
      // Predicated region
      $region17: #{tpu_custom_call.1} parent=15 // pred_check
        %p121 = pneg %p40
      $region18: #{tpu_custom_call.1} parent=15 // pred_check_branch
        %123 = sbr.rel (%p121) target = $region20
      $region19: #{tpu_custom_call.1} parent=15 // pred_region
        %p124 = scmp.lt.s32.totalorder %s15, 1
        %s125 = scalar_select %p124, %s15, 1
        %s126 = scalar_lea.vmem %s0, %s125
      $region20: #{tpu_custom_call.1} parent=15 // pred_fallthru
        _
      // Predicated region
      $region21: #{tpu_custom_call.1} parent=15 // pred_check
        %p127 = pneg %p68
      $region22: #{tpu_custom_call.1} parent=15 // pred_check_branch
        %129 = sbr.rel (%p127) target = $region24
      $region23: #{tpu_custom_call.1} parent=15 // pred_region
        %p130 = scmp.lt.s32.totalorder %s15, 1
        %s131 = scalar_select %p130, %s15, 1
        %p132 = scmp.lt.s32.totalorder %s16, 3
        %s133 = scalar_select %p132, %s16, 3
        %s134 = smul.addr %s131, 4
        %s135 = sadd.s32 %s133, %s134
        %s136 = smul.addr %s135, 8
        %s137 = scalar_lea.vmem %s1, %s136
      $region24: #{tpu_custom_call.1} parent=15 // pred_fallthru
        _
    $region16: #{tpu_custom_call.1} parent=5 // pred_fallthru
      _
    %p138 = scmp.le.s32.totalorder 1, %s8
    %p139 = scmp.lt.s32.totalorder %s8, 9
    %p140 = pnand %p138, %p139
    %p141 = pneg %p140
    // Predicated region
    $region25: #{tpu_custom_call.1} parent=5 // pred_check
      _
    $region26: #{tpu_custom_call.1} parent=5 // pred_check_branch
      %143 = sbr.rel (%p140) target = $region28
    $region27: #{tpu_custom_call.1} parent=5 // pred_region
      %s144 = ssub.s32 %s8, 1
      %p145 = scmp.lt.s32.totalorder %s17, 1
      %s146 = scalar_select %p145, %s17, 1
      %s147 = scalar_lea.vmem %s0, %s146
      %p148 = pneg %p46
      %p149 = pneg %p43
      %p150 = scmp.lt.s32.totalorder %s17, 1
      %s151 = scalar_select %p150, %s17, 1
      %p152 = scmp.lt.s32.totalorder %s18, 3
      %s153 = scalar_select %p152, %s18, 3
      %s154 = smul.addr %s151, 4
      %s155 = sadd.s32 %s153, %s154
      %s156 = smul.addr %s155, 8
      %s157 = scalar_lea.vmem %s1, %s156
      %p158 = pneg %p74
      %p159 = pneg %p71
      %p160 = pneg %p102
      %p161 = pneg %p99
      %p162 = scmp.lt.s32.totalorder %s17, 1
      %s163 = scalar_select %p162, %s17, 1
      %p164 = scmp.lt.s32.totalorder %s18, 3
      %s165 = scalar_select %p164, %s18, 3
      %s166 = smul.addr %s163, 4
      %s167 = sadd.s32 %s165, %s166
      %s168 = smul.addr %s167, 8
      %s169 = scalar_lea.vmem %s2, %s168
      %p170 = scmp.lt.s32.totalorder %s17, 1
      %s171 = scalar_select %p170, %s17, 1
      %s172 = scalar_lea.vmem %s0, %s171
      %p173 = scmp.lt.s32.totalorder %s17, 1
      %s174 = scalar_select %p173, %s17, 1
      %p175 = scmp.lt.s32.totalorder %s18, 3
      %s176 = scalar_select %p175, %s18, 3
      %s177 = smul.addr %s174, 4
      %s178 = sadd.s32 %s176, %s177
      %s179 = smul.addr %s178, 8
      %s180 = scalar_lea.vmem %s1, %s179
      %p181 = scmp.lt.s32.totalorder %s17, 1
      %s182 = scalar_select %p181, %s17, 1
      %p183 = scmp.lt.s32.totalorder %s18, 3
      %s184 = scalar_select %p183, %s18, 3
      %s185 = smul.addr %s182, 4
      %s186 = sadd.s32 %s184, %s185
      %s187 = smul.addr %s186, 8
      %s188 = scalar_lea.vmem %s2, %s187
      %v189 = vld [vmem:[%s172] sm:$0x1]
      %vm190 = vcmp.gt.s32.totalorder %v189, 0
      %v191 = vld [vmem:[%s180] sm:$0xff]
      %v192 = vsel %vm190, 1, 0
      %v193 = vlaneseq
      %v194 = vshrl.u32 %v193, 7
      %v195 = vsub.s32 0, %v194
      %v196 = vrot.slane %v192, %v195
      %vm197 = vcmp.eq.s32.totalorder %v196, 1
      %v198 = vsel %vm197, -inf, %v191
      %vm199 = vcmask 130048
      %v200 = vsel %vm199, %v198, -inf
      %201 = vrot.lane.b32.xlu0 %v200, 1
      %v202 = vpop.permute.xlu0 %201
      %v203 = vmax.f32 %v200, %v202
      %204 = vrot.lane.b32.xlu0 %v203, 2
      %v205 = vpop.permute.xlu0 %204
      %v206 = vmax.f32 %v203, %v205
      %207 = vrot.lane.b32.xlu0 %v206, 4
      %v208 = vpop.permute.xlu0 %207
      %v209 = vmax.f32 %v206, %v208
      %210 = vrot.lane.b32.xlu0 %v209, 8
      %v211 = vpop.permute.xlu0 %210
      %v212 = vmax.f32 %v209, %v211
      %213 = vst.msk [vmem:[%s188] sm:$0xff] %vm199, %v212
      %p214 = scmp.lt.s32.totalorder %s17, 1
      %s215 = scalar_select %p214, %s17, 1
      %p216 = scmp.lt.s32.totalorder %s18, 3
      %s217 = scalar_select %p216, %s18, 3
      %s218 = smul.addr %s215, 4
      %s219 = sadd.s32 %s217, %s218
      %s220 = smul.addr %s219, 8
      %s221 = scalar_lea.vmem %s2, %s220
      // Predicated region
      $region29: #{tpu_custom_call.1} parent=27 // pred_check
        %p222 = pneg %p99
      $region30: #{tpu_custom_call.1} parent=27 // pred_check_branch
        %224 = sbr.rel (%p222) target = $region32
      $region31: #{tpu_custom_call.1} parent=27 // pred_region
        _
      $region32: #{tpu_custom_call.1} parent=27 // pred_fallthru
        _
    $region28: #{tpu_custom_call.1} parent=5 // pred_fallthru
      _
    %p225 = scmp.le.s32.totalorder 2, %s8
    // Predicated region
    $region33: #{tpu_custom_call.1} parent=5 // pred_check
      %p226 = pneg %p225
    $region34: #{tpu_custom_call.1} parent=5 // pred_check_branch
      %228 = sbr.rel (%p226) target = $region36
    $region35: #{tpu_custom_call.1} parent=5 // pred_region
      %s229 = ssub.s32 %s8, 2
      // Predicated region
      $region37: #{tpu_custom_call.1} parent=35 // pred_check
        %p230 = pneg %p105
      $region38: #{tpu_custom_call.1} parent=35 // pred_check_branch
        %232 = sbr.rel (%p230) target = $region40
      $region39: #{tpu_custom_call.1} parent=35 // pred_region
        %p233 = scmp.lt.s32.totalorder %s19, 1
        %s234 = scalar_select %p233, %s19, 1
        %p235 = scmp.lt.s32.totalorder %s20, 3
        %s236 = scalar_select %p235, %s20, 3
        %s237 = smul.addr %s234, 4
        %s238 = sadd.s32 %s236, %s237
        %s239 = smul.addr %s238, 8
        %s240 = scalar_lea.vmem %s2, %s239
      $region40: #{tpu_custom_call.1} parent=35 // pred_fallthru
        _
    $region36: #{tpu_custom_call.1} parent=5 // pred_fallthru
      _
  $region6: #{tpu_custom_call.1} parent=0 // loop_footer
    %s12 = sadd.s32 1, %s8
  $region7: #{tpu_custom_call.1} parent=0 // loop_footer_branch
    %7 = sbr.rel target = $region3
  $region8: #{tpu_custom_call.1} parent=0 // loop_exit
    _

</llo_original>
